<compile_context>
chip_gen: v5e
topology: v5e:2x2
jax: 0.10.0
libtpu: 0.0.40
codegen_flags: <defaults>
</compile_context>

<pallas_src>
import functools
import math

import jax
import jax.numpy as jnp
from jax import lax
from jax.experimental import pallas as pl
from jax.experimental.pallas import tpu as pltpu


H1 = 100            # hidden sizes of the original module
H2 = 100
HPAD = 128          # per-head lane-padded hidden width
WIDTH = 2 * HPAD    # fused twin-head layer-1 lane width
TM = 128            # batch tile (matches v5e MXU; fine on v6e/v7x)


def _round_up(n, m):
    return (n + m - 1) // m * m


# ----------------------------------------------------------------------------
# Kernel: whole twin-Q forward pass for one batch tile.
#   xu_ref : (tm, KPAD)  zero-padded [x | u], weight dtype
#   s1_ref : (KPAD+8, 256)  layer-1 weights [w1|w4] + bias row [b1|b4]
#   s2_ref : (3*128+8, 128) w2 | w5 | [w3,w6] (lanes 0/1) | bias rows
#   out    : (tm, 128) f32, lane 0 = q1, lane 1 = q2, rest 0
# ----------------------------------------------------------------------------
def critic_kernel(xu_ref, s1_ref, s2_ref, out_ref, *, kpad):
    f32 = jnp.float32
    wdt = s1_ref.dtype

    xu = xu_ref[...]                                       # (tm, kpad), wdt

    # ---- layer 1: fused twin heads, one (tm,kpad)@(kpad,256) MXU op ----
    b1 = s1_ref[kpad:kpad + 8, :].astype(f32)              # aligned bias block
    h = jnp.dot(xu, s1_ref[0:kpad, :], preferred_element_type=f32)
    h = jnp.maximum(h + b1[0:1, :], 0.0)                   # (tm, 256) f32

    h1 = h[:, 0:HPAD].astype(wdt)                          # head-1 activations
    h2 = h[:, HPAD:WIDTH].astype(wdt)                      # head-2 activations

    # ---- layer 2: per-head 128x128 matmuls (no zero blocks DMA'd) ----
    btail = s2_ref[3 * HPAD:3 * HPAD + 8, :].astype(f32)   # b2 / b5 / [b3,b6]
    g1 = jnp.maximum(
        jnp.dot(h1, s2_ref[0:HPAD, :], preferred_element_type=f32)
        + btail[0:1, :], 0.0)
    g2 = jnp.maximum(
        jnp.dot(h2, s2_ref[HPAD:2 * HPAD, :], preferred_element_type=f32)
        + btail[1:2, :], 0.0)

    # ---- layer 3: shared (128,128) section, w3 in lane 0, w6 in lane 1 ----
    w36 = s2_ref[2 * HPAD:3 * HPAD, :]
    p1 = jnp.dot(g1.astype(wdt), w36, preferred_element_type=f32)  # lane0 = q1
    p2 = jnp.dot(g2.astype(wdt), w36, preferred_element_type=f32)  # lane1 = q2
    lane = lax.broadcasted_iota(jnp.int32, p1.shape, 1)
    # lanes >= 2 of p2 multiply zero weight columns -> 0; bias lanes >=2 are 0.
    out_ref[...] = jnp.where(lane == 0, p1, p2) + btail[2:3, :]


# ----------------------------------------------------------------------------
# Parameter packing (done once, reused every forward call).
# Weights are (in_features, out_features); biases (1, out_features).
# ----------------------------------------------------------------------------
def pack_critic_params(params, state_dim, action_dim, dtype=jnp.bfloat16):
    S, A = state_dim, action_dim
    SP, AP = _round_up(S, 8), _round_up(A, 8)
    KPAD = SP + AP

    # slab 1: fused layer-1 [w1 | w4] (head-1 lanes 0:128, head-2 128:256)
    s1 = jnp.zeros((KPAD + 8, WIDTH), jnp.float32)
    s1 = s1.at[0:S, 0:H1].set(params["w1"][:S])
    s1 = s1.at[0:S, HPAD:HPAD + H1].set(params["w4"][:S])
    s1 = s1.at[SP:SP + A, 0:H1].set(params["w1"][S:])
    s1 = s1.at[SP:SP + A, HPAD:HPAD + H1].set(params["w4"][S:])
    s1 = s1.at[KPAD, 0:H1].set(params["b1"][0])
    s1 = s1.at[KPAD, HPAD:HPAD + H1].set(params["b4"][0])

    # slab 2: w2 | w5 | [w3 lane0, w6 lane1] | merged bias rows
    s2 = jnp.zeros((3 * HPAD + 8, HPAD), jnp.float32)
    s2 = s2.at[0:H1, 0:H2].set(params["w2"])
    s2 = s2.at[HPAD:HPAD + H1, 0:H2].set(params["w5"])
    s2 = s2.at[2 * HPAD:2 * HPAD + H2, 0:1].set(params["w3"])
    s2 = s2.at[2 * HPAD:2 * HPAD + H2, 1:2].set(params["w6"])
    s2 = s2.at[3 * HPAD, 0:H2].set(params["b2"][0])
    s2 = s2.at[3 * HPAD + 1, 0:H2].set(params["b5"][0])
    s2 = s2.at[3 * HPAD + 2, 0].set(params["b3"][0, 0])
    s2 = s2.at[3 * HPAD + 2, 1].set(params["b6"][0, 0])
    return s1.astype(dtype), s2.astype(dtype)


# ----------------------------------------------------------------------------
# Wrapper: Critic.forward(x, u) -> (q1, q2)
# ----------------------------------------------------------------------------
def critic_forward(x, u, slabs):
    s1, s2 = slabs
    B, S = x.shape
    A = u.shape[1]
    SP, AP = _round_up(S, 8), _round_up(A, 8)
    KPAD = SP + AP
    assert s1.shape == (KPAD + 8, WIDTH) and s2.shape == (3 * HPAD + 8, HPAD)

    # batch padding / tiling
    Bp = _round_up(B, 8)
    tm = Bp if Bp <= TM else TM
    Bp = _round_up(Bp, tm)
    grid = (Bp // tm,)

    # zero-padded, 8-aligned [x | u] in the weight dtype (cheap, fuses)
    xu = jnp.zeros((Bp, KPAD), jnp.float32)
    xu = xu.at[:B, :S].set(x)
    xu = xu.at[:B, SP:SP + A].set(u)
    xu = xu.astype(s1.dtype)

    wbytes = jnp.dtype(s1.dtype).itemsize
    flops = 2 * Bp * (KPAD * WIDTH + 4 * HPAD * HPAD)
    bytes_accessed = (xu.size + s1.size + s2.size) * wbytes + Bp * HPAD * 4

    out = pl.pallas_call(
        functools.partial(critic_kernel, kpad=KPAD),
        out_shape=jax.ShapeDtypeStruct((Bp, HPAD), jnp.float32),
        grid=grid,
        in_specs=[
            pl.BlockSpec((tm, KPAD), lambda i: (i, 0)),     # batch tile of [x|u]
            pl.BlockSpec(s1.shape, lambda i: (0, 0)),       # resident weights
            pl.BlockSpec(s2.shape, lambda i: (0, 0)),       # resident weights
        ],
        out_specs=pl.BlockSpec((tm, HPAD), lambda i: (i, 0)),
        compiler_params=pltpu.CompilerParams(
            dimension_semantics=("parallel",)),
        cost_estimate=pl.CostEstimate(
            flops=flops, transcendentals=0, bytes_accessed=bytes_accessed),
    )(xu, s1, s2)

    q1 = out[:B, 0:1]
    q2 = out[:B, 1:2]
    return q1, q2


# ----------------------------------------------------------------------------
# Deterministic parameter init (mirrors nn.Linear default U(-1/sqrt(fan_in),+))
# ----------------------------------------------------------------------------
def init_critic_params(key, state_dim, action_dim, h1=H1, h2=H2):
    dims = [
        (state_dim + action_dim, h1),  # l1
        (h1, h2),                      # l2
        (h2, 1),                       # l3
        (state_dim + action_dim, h1),  # l4
        (h1, h2),                      # l5
        (h2, 1),                       # l6
    ]
    params = {}
    keys = jax.random.split(key, 2 * len(dims))
    for i, (fan_in, fan_out) in enumerate(dims):
        bound = 1.0 / math.sqrt(fan_in)
        params[f"w{i + 1}"] = jax.random.uniform(
            keys[2 * i], (fan_in, fan_out), jnp.float32, -bound, bound)
        params[f"b{i + 1}"] = jax.random.uniform(
            keys[2 * i + 1], (1, fan_out), jnp.float32, -bound, bound)
    return params


# ----------------------------------------------------------------------------
# Pure-JAX references
# ----------------------------------------------------------------------------
def critic_ref(x, u, p):
    """Exact f32 reference of the PyTorch module."""
    hp = lax.Precision.HIGHEST
    xu = jnp.concatenate([x, u], axis=1)
    h = jax.nn.relu(jnp.dot(xu, p["w1"], precision=hp) + p["b1"])
    h = jax.nn.relu(jnp.dot(h, p["w2"], precision=hp) + p["b2"])
    q1 = jnp.dot(h, p["w3"], precision=hp) + p["b3"]
    g = jax.nn.relu(jnp.dot(xu, p["w4"], precision=hp) + p["b4"])
    g = jax.nn.relu(jnp.dot(g, p["w5"], precision=hp) + p["b5"])
    q2 = jnp.dot(g, p["w6"], precision=hp) + p["b6"]
    return q1, q2


def critic_ref_emulated(x, u, p, wdtype):
    """Reference that mirrors the kernel's cast points (bf16 weights/activations,
    f32 accumulation) so the kernel can be checked to tight tolerance."""
    hp = lax.Precision.HIGHEST
    c = lambda a: a.astype(wdtype).astype(jnp.float32)
    xu = c(jnp.concatenate([x, u], axis=1))

    def head(wa, ba, wb, bb, wc, bc):
        h = jax.nn.relu(jnp.dot(xu, c(wa), precision=hp) + c(ba))
        h = jax.nn.relu(jnp.dot(c(h), c(wb), precision=hp) + c(bb))
        return jnp.dot(c(h), c(wc), precision=hp) + c(bc)

    q1 = head(p["w1"], p["b1"], p["w2"], p["b2"], p["w3"], p["b3"])
    q2 = head(p["w4"], p["b4"], p["w5"], p["b5"], p["w6"], p["b6"])
    return q1, q2


if __name__ == "__main__":
    # metaworld button-press-v2: obs dim 39, action dim 4 (hard-coded; no env needed)
    state_dim, action_dim = 39, 4
    wdtype = jnp.bfloat16

    key = jax.random.PRNGKey(0)
    k_params, k_x, k_u, k_x2, k_u2 = jax.random.split(key, 5)

    params = init_critic_params(k_params, state_dim, action_dim)
    slabs = pack_critic_params(params, state_dim, action_dim, dtype=wdtype)

    def check(x, u):
        q1, q2 = critic_forward(x, u, slabs)
        jax.block_until_ready((q1, q2))
        B = x.shape[0]
        assert q1.shape == (B, 1) and q2.shape == (B, 1)
        # tight check vs. a reference with identical bf16 cast points
        q1e, q2e = critic_ref_emulated(x, u, params, wdtype)
        assert jnp.allclose(q1, q1e, atol=2e-4, rtol=2e-4)
        assert jnp.allclose(q2, q2e, atol=2e-4, rtol=2e-4)
        # semantics check vs. the exact f32 module (bf16 weight rounding slack)
        q1r, q2r = critic_ref(x, u, params)
        assert jnp.allclose(q1, q1r, atol=5e-2, rtol=5e-2)
        assert jnp.allclose(q2, q2r, atol=5e-2, rtol=5e-2)

    # TD3-style replay minibatch: exercises the 2-tile parallel batch grid
    B1 = 256
    x1 = jax.random.normal(k_x, (B1, state_dim), jnp.float32)
    u1 = jax.random.uniform(k_u, (B1, action_dim), jnp.float32, -1.0, 1.0)
    check(x1, u1)

    # tiny, non-aligned batch: exercises the padding path (single tile)
    B2 = 5
    x2 = jax.random.normal(k_x2, (B2, state_dim), jnp.float32)
    u2 = jax.random.uniform(k_u2, (B2, action_dim), jnp.float32, -1.0, 1.0)
    check(x2, u2)

    print("KERNEL_OK")
</pallas_src>

<mosaic_0001>
module attributes {stable_mosaic.version = 11 : i64} {
  func.func @critic_kernel(%arg0: i32, %arg1: memref<128x48xbf16, #tpu.memory_space<vmem>>, %arg2: memref<56x256xbf16, #tpu.memory_space<vmem>>, %arg3: memref<392x128xbf16, #tpu.memory_space<vmem>>, %arg4: memref<128x128xf32, #tpu.memory_space<vmem>>) attributes {dimension_semantics = [#tpu.dimension_semantics<parallel>], iteration_bounds = array<i64: 2>, scalar_prefetch = 0 : i64, scratch_operands = 0 : i64, tpu.core_type = #tpu.core_type<tc>, window_params = [{transform_indices = @transform_0, window_bounds = array<i64: 128, 48>}, {pipeline_mode = #tpu.pipeline_mode<synchronous>, transform_indices = @transform_1, window_bounds = array<i64: 56, 256>}, {pipeline_mode = #tpu.pipeline_mode<synchronous>, transform_indices = @transform_2, window_bounds = array<i64: 392, 128>}, {transform_indices = @transform_3, window_bounds = array<i64: 128, 128>}]} {
    %c0 = arith.constant 0 : index
    %c0_0 = arith.constant 0 : index
    %0 = vector.load %arg1[%c0, %c0_0] : memref<128x48xbf16, #tpu.memory_space<vmem>>, vector<128x48xbf16>
    %c48 = arith.constant 48 : index
    %c0_1 = arith.constant 0 : index
    %1 = vector.load %arg2[%c48, %c0_1] : memref<56x256xbf16, #tpu.memory_space<vmem>>, vector<8x256xbf16>
    %2 = arith.extf %1 : vector<8x256xbf16> to vector<8x256xf32>
    %c0_2 = arith.constant 0 : index
    %c0_3 = arith.constant 0 : index
    %3 = vector.load %arg2[%c0_2, %c0_3] : memref<56x256xbf16, #tpu.memory_space<vmem>>, vector<48x256xbf16>
    %cst = arith.constant dense<0.000000e+00> : vector<128x256xf32>
    %4 = tpu.matmul %0, %3, %cst {dimension_numbers = #tpu.dot_dimension_numbers<[1], [0], [0], [1], [0, 0, 1, 1], [], []>} : vector<128x48xbf16>, vector<48x256xbf16>, vector<128x256xf32> -> vector<128x256xf32>
    %5 = vector.extract_strided_slice %2 {offsets = [0, 0], sizes = [1, 256], strides = [1, 1]} : vector<8x256xf32> to vector<1x256xf32>
    %6 = vector.broadcast %5 : vector<1x256xf32> to vector<128x256xf32>
    %7 = arith.addf %4, %6 : vector<128x256xf32>
    %cst_4 = arith.constant 0.000000e+00 : f32
    %8 = vector.broadcast %cst_4 : f32 to vector<128x256xf32>
    %9 = arith.maximumf %7, %8 : vector<128x256xf32>
    %10 = vector.extract_strided_slice %9 {offsets = [0, 0], sizes = [128, 128], strides = [1, 1]} : vector<128x256xf32> to vector<128x128xf32>
    %11 = arith.truncf %10 : vector<128x128xf32> to vector<128x128xbf16>
    %12 = vector.extract_strided_slice %9 {offsets = [0, 128], sizes = [128, 128], strides = [1, 1]} : vector<128x256xf32> to vector<128x128xf32>
    %13 = arith.truncf %12 : vector<128x128xf32> to vector<128x128xbf16>
    %c384 = arith.constant 384 : index
    %c0_5 = arith.constant 0 : index
    %14 = vector.load %arg3[%c384, %c0_5] : memref<392x128xbf16, #tpu.memory_space<vmem>>, vector<8x128xbf16>
    %15 = arith.extf %14 : vector<8x128xbf16> to vector<8x128xf32>
    %c0_6 = arith.constant 0 : index
    %c0_7 = arith.constant 0 : index
    %16 = vector.load %arg3[%c0_6, %c0_7] : memref<392x128xbf16, #tpu.memory_space<vmem>>, vector<128x128xbf16>
    %cst_8 = arith.constant dense<0.000000e+00> : vector<128x128xf32>
    %17 = tpu.matmul %11, %16, %cst_8 {dimension_numbers = #tpu.dot_dimension_numbers<[1], [0], [0], [1], [0, 0, 1, 1], [], []>} : vector<128x128xbf16>, vector<128x128xbf16>, vector<128x128xf32> -> vector<128x128xf32>
    %18 = vector.extract_strided_slice %15 {offsets = [0, 0], sizes = [1, 128], strides = [1, 1]} : vector<8x128xf32> to vector<1x128xf32>
    %19 = vector.broadcast %18 : vector<1x128xf32> to vector<128x128xf32>
    %20 = arith.addf %17, %19 : vector<128x128xf32>
    %cst_9 = arith.constant 0.000000e+00 : f32
    %21 = vector.broadcast %cst_9 : f32 to vector<128x128xf32>
    %22 = arith.maximumf %20, %21 : vector<128x128xf32>
    %c128 = arith.constant 128 : index
    %c0_10 = arith.constant 0 : index
    %23 = vector.load %arg3[%c128, %c0_10] : memref<392x128xbf16, #tpu.memory_space<vmem>>, vector<128x128xbf16>
    %cst_11 = arith.constant dense<0.000000e+00> : vector<128x128xf32>
    %24 = tpu.matmul %13, %23, %cst_11 {dimension_numbers = #tpu.dot_dimension_numbers<[1], [0], [0], [1], [0, 0, 1, 1], [], []>} : vector<128x128xbf16>, vector<128x128xbf16>, vector<128x128xf32> -> vector<128x128xf32>
    %25 = vector.extract_strided_slice %15 {offsets = [1, 0], sizes = [1, 128], strides = [1, 1]} : vector<8x128xf32> to vector<1x128xf32>
    %26 = vector.broadcast %25 : vector<1x128xf32> to vector<128x128xf32>
    %27 = arith.addf %24, %26 : vector<128x128xf32>
    %cst_12 = arith.constant 0.000000e+00 : f32
    %28 = vector.broadcast %cst_12 : f32 to vector<128x128xf32>
    %29 = arith.maximumf %27, %28 : vector<128x128xf32>
    %c256 = arith.constant 256 : index
    %c0_13 = arith.constant 0 : index
    %30 = vector.load %arg3[%c256, %c0_13] : memref<392x128xbf16, #tpu.memory_space<vmem>>, vector<128x128xbf16>
    %31 = arith.truncf %22 : vector<128x128xf32> to vector<128x128xbf16>
    %cst_14 = arith.constant dense<0.000000e+00> : vector<128x128xf32>
    %32 = tpu.matmul %31, %30, %cst_14 {dimension_numbers = #tpu.dot_dimension_numbers<[1], [0], [0], [1], [0, 0, 1, 1], [], []>} : vector<128x128xbf16>, vector<128x128xbf16>, vector<128x128xf32> -> vector<128x128xf32>
    %33 = arith.truncf %29 : vector<128x128xf32> to vector<128x128xbf16>
    %cst_15 = arith.constant dense<0.000000e+00> : vector<128x128xf32>
    %34 = tpu.matmul %33, %30, %cst_15 {dimension_numbers = #tpu.dot_dimension_numbers<[1], [0], [0], [1], [0, 0, 1, 1], [], []>} : vector<128x128xbf16>, vector<128x128xbf16>, vector<128x128xf32> -> vector<128x128xf32>
    %35 = tpu.iota {dimensions = array<i32: 1>} : vector<128x128xi32>
    %c0_i32 = arith.constant 0 : i32
    %36 = vector.broadcast %c0_i32 : i32 to vector<128x128xi32>
    %37 = arith.cmpi eq, %35, %36 : vector<128x128xi32>
    %38 = arith.select %37, %32, %34 : vector<128x128xi1>, vector<128x128xf32>
    %39 = vector.extract_strided_slice %15 {offsets = [2, 0], sizes = [1, 128], strides = [1, 1]} : vector<8x128xf32> to vector<1x128xf32>
    %40 = vector.broadcast %39 : vector<1x128xf32> to vector<128x128xf32>
    %41 = arith.addf %38, %40 : vector<128x128xf32>
    %c0_16 = arith.constant 0 : index
    %c0_17 = arith.constant 0 : index
    %42 = vector.load %arg4[%c0_16, %c0_17] : memref<128x128xf32, #tpu.memory_space<vmem>>, vector<128x128xf32>
    tpu.vector_store %arg4[%c0_16, %c0_17], %41 {strides = array<i32>} : memref<128x128xf32, #tpu.memory_space<vmem>>, vector<128x128xf32>,
    return
  }
  func.func @transform_0(%arg0: i32) -> (i32, i32) {
    %c0_i32 = arith.constant 0 : i32
    %c0_i32_0 = arith.constant 0 : i32
    return %arg0, %c0_i32 : i32, i32
  }
  func.func @transform_1(%arg0: i32) -> (i32, i32) {
    %c0_i32 = arith.constant 0 : i32
    %c0_i32_0 = arith.constant 0 : i32
    %c0_i32_1 = arith.constant 0 : i32
    return %c0_i32, %c0_i32_0 : i32, i32
  }
  func.func @transform_2(%arg0: i32) -> (i32, i32) {
    %c0_i32 = arith.constant 0 : i32
    %c0_i32_0 = arith.constant 0 : i32
    %c0_i32_1 = arith.constant 0 : i32
    return %c0_i32, %c0_i32_0 : i32, i32
  }
  func.func @transform_3(%arg0: i32) -> (i32, i32) {
    %c0_i32 = arith.constant 0 : i32
    %c0_i32_0 = arith.constant 0 : i32
    return %arg0, %c0_i32 : i32, i32
  }
}

</mosaic_0001>

<llo_original>
// kernel: tpu_custom_call.1
$region0: #{tpu_custom_call.1}
  #allocation0 [shape = 'u32[]', space=smem, size = 0x4, offset = 0x4, fixed_abs, tag = 'smem constant byte address 0x4 - core index']
  #allocation1 [shape = 'u32[72,128]{1,0:T(1,128)}', space=vmem, size = 0x9000, scoped, tag = 'internal scratch']
  %s0 = inlined_call_operand.vmem [shape: bf16[256,48], index: 0, kind: input, shape index: {}]
  %s1 = inlined_call_operand.vmem [shape: bf16[56,256], index: 1, kind: input, shape index: {}]
  %s2 = inlined_call_operand.hbm [shape: bf16[392,128], index: 2, kind: input, shape index: {}]
  %s3 = inlined_call_operand.hbm [shape: f32[256,128], index: 3, kind: output, shape index: {}]
  %s4 = sld [smem:[#allocation0]]
  $region49: #{tpu_custom_call.1} parent=0
    _
  %s6 = ssub.s32 1, %s4
  %s7 = scalar_select 0, %s6, %s4
  $region1: #{tpu_custom_call.1} parent=0
    #allocation2 [shape = 'u8[100352]{0}', space=vmem, size = 0x18800, scoped, tag = 'input window, operand 2, single buffered']
    #allocation3 [shape = 's32[2]{0}', space=sflag, size = 0x8, scoped, tag = 'scoped memory for tpu_custom_call.1']
    #allocation4 [shape = 's32[2]{0}', space=sflag, size = 0x8, scoped, tag = 'scoped memory for tpu_custom_call.1']
    #allocation5 [shape = 'u8[131072]{0}', space=vmem, size = 0x20000, scoped, tag = 'output window, operand 0']
    %8 = vsyncpa [#allocation3], 0
    %9 = vsyncpa [#allocation4], 0
    %s10 = scalar_lea.sflag [#allocation4], 1
    %11 = vsyncpa %s10, 0
    loop: start=0, step=1, limit=4
    $region2: #{tpu_custom_call.1} parent=1 // loop_pre_header
      _
    $region3: #{tpu_custom_call.1} parent=1 // loop_header
      %s13 = sphi 0, %s17
      %p14 = scmp.ge.s32.totalorder %s13, 4
      %s23 = sphi 0, %s25
      %s26 = sphi 0, %s23
      %s27 = sphi 0, %s26
      %s43 = sphi 0, %s27
      %s47 = sphi 0, %s47
      %s49 = sphi 0, %s47
      %s50 = sphi 0, %s49
      %s64 = sphi 0, %s50
      %s68 = sphi 0, %s68
      %s70 = sphi 0, %s68
      %s71 = sphi 0, %s70
      %s85 = sphi 0, %s71
      %s91 = sphi 0, %s93
      %s94 = sphi 0, %s91
      %s95 = sphi 0, %s94
      %s111 = sphi 0, %s95
    $region4: #{tpu_custom_call.1} parent=1 // loop_header_branch
      %16 = sbr.rel (%p14) target = $region8
    $region5: #{tpu_custom_call.1} parent=1 // loop_body
      %s18 = ssub.s32 %s13, 1
      %s19 = ssub.s32 %s13, 2
      %s20 = sadd.s32 %s13, 1
      %s21 = ssub.s32 %s13, %s20
      %p22 = scmp.eq.s32.totalorder %s21, 0
      %s24 = sadd.s32 %s23, 1
      %s25 = scalar_select %p22, %s23, %s24
      %p28 = pneg %p22
      %p29 = scmp.eq.s32.totalorder %s13, 1
      %p30 = por %p28, %p29
      %p31 = scmp.ne.s32.totalorder %s23, %s26
      %p32 = scmp.eq.s32.totalorder %s13, 0
      %p33 = por %p31, %p32
      %p34 = scmp.ne.s32.totalorder %s23, %s26
      %p35 = scmp.eq.s32.totalorder %s18, 1
      %p36 = por %p34, %p35
      %p37 = scmp.ne.s32.totalorder %s26, %s27
      %p38 = scmp.eq.s32.totalorder %s18, 0
      %p39 = por %p37, %p38
      %p40 = scmp.ne.s32.totalorder %s26, %s27
      %p41 = scmp.eq.s32.totalorder %s19, 1
      %p42 = por %p40, %p41
      %p44 = scmp.ne.s32.totalorder %s27, %s43
      %p45 = scmp.eq.s32.totalorder %s19, 0
      %p46 = por %p44, %p45
      %s48 = sadd.s32 %s47, 1
      %p51 = scmp.eq.s32.totalorder %s13, 1
      %p52 = scmp.ne.s32.totalorder %s47, %s49
      %p53 = scmp.eq.s32.totalorder %s13, 0
      %p54 = por %p52, %p53
      %p55 = scmp.ne.s32.totalorder %s47, %s49
      %p56 = scmp.eq.s32.totalorder %s18, 1
      %p57 = por %p55, %p56
      %p58 = scmp.ne.s32.totalorder %s49, %s50
      %p59 = scmp.eq.s32.totalorder %s18, 0
      %p60 = por %p58, %p59
      %p61 = scmp.ne.s32.totalorder %s49, %s50
      %p62 = scmp.eq.s32.totalorder %s19, 1
      %p63 = por %p61, %p62
      %p65 = scmp.ne.s32.totalorder %s50, %s64
      %p66 = scmp.eq.s32.totalorder %s19, 0
      %p67 = por %p65, %p66
      %s69 = sadd.s32 %s68, 1
      %p72 = scmp.eq.s32.totalorder %s13, 1
      %p73 = scmp.ne.s32.totalorder %s68, %s70
      %p74 = scmp.eq.s32.totalorder %s13, 0
      %p75 = por %p73, %p74
      %p76 = scmp.ne.s32.totalorder %s68, %s70
      %p77 = scmp.eq.s32.totalorder %s18, 1
      %p78 = por %p76, %p77
      %p79 = scmp.ne.s32.totalorder %s70, %s71
      %p80 = scmp.eq.s32.totalorder %s18, 0
      %p81 = por %p79, %p80
      %p82 = scmp.ne.s32.totalorder %s70, %s71
      %p83 = scmp.eq.s32.totalorder %s19, 1
      %p84 = por %p82, %p83
      %p86 = scmp.ne.s32.totalorder %s71, %s85
      %p87 = scmp.eq.s32.totalorder %s19, 0
      %p88 = por %p86, %p87
      %s89 = ssub.s32 %s13, %s20
      %p90 = scmp.eq.s32.totalorder %s89, 0
      %s92 = sadd.s32 %s91, 1
      %s93 = scalar_select %p90, %s91, %s92
      %p96 = pneg %p90
      %p97 = scmp.eq.s32.totalorder %s13, 1
      %p98 = por %p96, %p97
      %p99 = scmp.ne.s32.totalorder %s91, %s94
      %p100 = scmp.eq.s32.totalorder %s13, 0
      %p101 = por %p99, %p100
      %p102 = scmp.ne.s32.totalorder %s91, %s94
      %p103 = scmp.eq.s32.totalorder %s18, 1
      %p104 = por %p102, %p103
      %p105 = scmp.ne.s32.totalorder %s94, %s95
      %p106 = scmp.eq.s32.totalorder %s18, 0
      %p107 = por %p105, %p106
      %p108 = scmp.ne.s32.totalorder %s94, %s95
      %p109 = scmp.eq.s32.totalorder %s19, 1
      %p110 = por %p108, %p109
      %p112 = scmp.ne.s32.totalorder %s95, %s111
      %p113 = scmp.eq.s32.totalorder %s19, 0
      %p114 = por %p112, %p113
      %p115 = scmp.le.s32.totalorder 1, %s13
      %p116 = scmp.lt.s32.totalorder %s13, 3
      %p117 = pnand %p115, %p116
      %p118 = pneg %p117
      // Predicated region
      $region9: #{tpu_custom_call.1} parent=5 // pred_check
        _
      $region10: #{tpu_custom_call.1} parent=5 // pred_check_branch
        %120 = sbr.rel (%p117) target = $region12
      $region11: #{tpu_custom_call.1} parent=5 // pred_region
        %s121 = ssub.s32 %s13, 1
        // Predicated region
        $region13: #{tpu_custom_call.1} parent=11 // pred_check
          %p122 = pneg %p60
        $region14: #{tpu_custom_call.1} parent=11 // pred_check_branch
          %124 = sbr.rel (%p122) target = $region16
        $region15: #{tpu_custom_call.1} parent=11 // pred_region
          _
        $region16: #{tpu_custom_call.1} parent=11 // pred_fallthru
          _
        // Predicated region
        $region17: #{tpu_custom_call.1} parent=11 // pred_check
          %p125 = pneg %p81
        $region18: #{tpu_custom_call.1} parent=11 // pred_check_branch
          %127 = sbr.rel (%p125) target = $region20
        $region19: #{tpu_custom_call.1} parent=11 // pred_region
          %129 = vsyncadd [#allocation3], 0
          %s130 = sshll.u32 %s2, 4
          %s131 = int_to_ptr.hbm [resolvable:$true] %s130
          %s132 = sshll.u32 [#allocation2], 4
          %s133 = int_to_ptr.vmem [resolvable:$true] %s132
          %138 = dma.hbm_to_vmem [thread:$0]  %s131, 3136, %s133, [#allocation3], 64, 64, 4
        $region20: #{tpu_custom_call.1} parent=11 // pred_fallthru
          _
      $region12: #{tpu_custom_call.1} parent=5 // pred_fallthru
        _
      %p139 = scmp.lt.s32.totalorder %s13, 2
      // Predicated region
      $region21: #{tpu_custom_call.1} parent=5 // pred_check
        %p140 = pneg %p139
      $region22: #{tpu_custom_call.1} parent=5 // pred_check_branch
        %142 = sbr.rel (%p140) target = $region24
      $region23: #{tpu_custom_call.1} parent=5 // pred_region
        // Predicated region
        $region25: #{tpu_custom_call.1} parent=23 // pred_check
          %p143 = pneg %p33
        $region26: #{tpu_custom_call.1} parent=23 // pred_check_branch
          %145 = sbr.rel (%p143) target = $region28
        $region27: #{tpu_custom_call.1} parent=23 // pred_region
          %s146 = smul.u32 16, %s13
          %p147 = scmp.lt.s32.totalorder %s146, 31
          %s148 = scalar_select %p147, %s146, 31
          %s149 = smul.addr %s148, 4
          %s150 = scalar_lea.vmem %s0, %s149
          %s151 = smul.u32 16, %s13
        $region28: #{tpu_custom_call.1} parent=23 // pred_fallthru
          _
      $region24: #{tpu_custom_call.1} parent=5 // pred_fallthru
        _
      %p152 = scmp.le.s32.totalorder 1, %s13
      %p153 = scmp.lt.s32.totalorder %s13, 3
      %p154 = pnand %p152, %p153
      %p155 = pneg %p154
      // Predicated region
      $region29: #{tpu_custom_call.1} parent=5 // pred_check
        _
      $region30: #{tpu_custom_call.1} parent=5 // pred_check_branch
        %157 = sbr.rel (%p154) target = $region32
      $region31: #{tpu_custom_call.1} parent=5 // pred_region
        %s158 = ssub.s32 %s13, 1
        // Predicated region
        $region33: #{tpu_custom_call.1} parent=31 // pred_check
          %p159 = pneg %p81
        $region34: #{tpu_custom_call.1} parent=31 // pred_check_branch
          %161 = sbr.rel (%p159) target = $region36
        $region35: #{tpu_custom_call.1} parent=31 // pred_region
          %163 = dma.done [#allocation3], 3136
        $region36: #{tpu_custom_call.1} parent=31 // pred_fallthru
          _
        %s164 = smul.u32 16, %s18
        %p165 = scmp.lt.s32.totalorder %s164, 31
        %s166 = scalar_select %p165, %s164, 31
        %s167 = smul.addr %s166, 4
        %s168 = scalar_lea.vmem %s0, %s167
        %p169 = pneg %p39
        %p170 = pneg %p36
        %p171 = pneg %p60
        %p172 = pneg %p57
        %p173 = pneg %p81
        %p174 = pneg %p78
        %p175 = pneg %p107
        %p176 = pneg %p104
        %s177 = sand.u32 %s94, 1
        %s178 = scalar_lea.sflag [#allocation4], %s177
        %s179 = sand.u32 %s94, 1
        %s180 = smul.addr %s179, 128
        %s181 = scalar_lea.vmem [#allocation5], %s180
        %s182 = smul.u32 16, %s18
        %p183 = scmp.lt.s32.totalorder %s182, 31
        %s184 = scalar_select %p183, %s182, 31
        %s185 = smul.addr %s184, 4
        %s186 = scalar_lea.vmem %s0, %s185
        %s187 = smul.u32 16, %s18
        %s188 = smul.u32 16, %s18
        %v190 = vld [vmem:[%s186] sm:$0xf]
        %v191 = vld [vmem:[%s186 + $0x4] sm:$0xf]
        %v192 = vld [vmem:[%s186 + $0x8] sm:$0xf]
        %v193 = vld [vmem:[%s186 + $0xc] sm:$0xf]
        %v194 = vld [vmem:[%s186 + $0x10] sm:$0xf]
        %v195 = vld [vmem:[%s186 + $0x14] sm:$0xf]
        %v196 = vld [vmem:[%s186 + $0x18] sm:$0xf]
        %v197 = vld [vmem:[%s186 + $0x1c] sm:$0xf]
        %v198 = vld [vmem:[%s186 + $0x20] sm:$0xf]
        %v199 = vld [vmem:[%s186 + $0x24] sm:$0xf]
        %v200 = vld [vmem:[%s186 + $0x28] sm:$0xf]
        %v201 = vld [vmem:[%s186 + $0x2c] sm:$0xf]
        %v202 = vld [vmem:[%s186 + $0x30] sm:$0xf]
        %v203 = vld [vmem:[%s186 + $0x34] sm:$0xf]
        %v204 = vld [vmem:[%s186 + $0x38] sm:$0xf]
        %v205 = vld [vmem:[%s186 + $0x3c] sm:$0xf]
        %v206 = vld [vmem:[%s1 + $0x30] sm:$0xff]
        %v207 = vunpack.c.l.bf16 %v206
        %v208 = vunpack.c.h.bf16 %v206
        %v209 = vld [vmem:[%s1] sm:$0xff]
        %v210 = vld [vmem:[%s1 + $0x8] sm:$0xff]
        %v211 = vld [vmem:[%s1 + $0x10] sm:$0xff]
        %v212 = vld [vmem:[%s1 + $0x18] sm:$0xff]
        %v213 = vld [vmem:[%s1 + $0x20] sm:$0xff]
        %v214 = vld [vmem:[%s1 + $0x28] sm:$0xff]
        %v215 = vperm.slane %v207, 0
        %v216 = vperm.slane %v208, 0
        %v233 = vunpack.c.l.b16 %v190
        %v234 = vunpack.c.l.b16 %v191
        %v235 = vunpack.c.l.b16 %v192
        %v236 = vunpack.c.l.b16 %v193
        %v237 = vunpack.c.l.b16 %v194
        %v238 = vunpack.c.l.b16 %v195
        %v239 = vunpack.c.l.b16 %v196
        %v240 = vunpack.c.l.b16 %v197
        %v241 = vunpack.c.l.b16 %v198
        %v242 = vunpack.c.l.b16 %v199
        %v243 = vunpack.c.l.b16 %v200
        %v244 = vunpack.c.l.b16 %v201
        %v245 = vunpack.c.l.b16 %v202
        %v246 = vunpack.c.l.b16 %v203
        %v247 = vunpack.c.l.b16 %v204
        %v248 = vunpack.c.l.b16 %v205
        %v249 = vpack.c.b16 %v234, %v233
        %v250 = vpack.c.b16 %v236, %v235
        %v251 = vpack.c.b16 %v238, %v237
        %v252 = vpack.c.b16 %v240, %v239
        %v253 = vpack.c.b16 %v242, %v241
        %v254 = vpack.c.b16 %v244, %v243
        %v255 = vpack.c.b16 %v246, %v245
        %v256 = vpack.c.b16 %v248, %v247
        %v263 = vunpack.c.l.b16 %v209
        %v264 = vunpack.c.h.b16 %v209
        %v265 = vunpack.c.l.b16 %v210
        %v266 = vunpack.c.h.b16 %v210
        %v267 = vunpack.c.l.b16 %v211
        %v268 = vunpack.c.h.b16 %v211
        %v269 = vunpack.c.l.b16 %v212
        %v270 = vunpack.c.h.b16 %v212
        %v271 = vunpack.c.l.b16 %v213
        %v272 = vunpack.c.h.b16 %v213
        %v273 = vunpack.c.l.b16 %v214
        %v274 = vunpack.c.h.b16 %v214
        %v275 = vpack.c.b16 %v265, %v263
        %v276 = vpack.c.b16 %v266, %v264
        %v277 = vpack.c.b16 %v269, %v267
        %v278 = vpack.c.b16 %v270, %v268
        %v279 = vpack.c.b16 %v273, %v271
        %v280 = vpack.c.b16 %v274, %v272
        %vm287 = vcmask 392192
        %v289 = vsel %vm287, %v249, 0
        %v292 = vsel %vm287, %v250, 0
        %v295 = vsel %vm287, %v251, 0
        %v298 = vsel %vm287, %v252, 0
        %v301 = vsel %vm287, %v253, 0
        %v304 = vsel %vm287, %v254, 0
        %v307 = vsel %vm287, %v255, 0
        %v310 = vsel %vm287, %v256, 0
        %312 = vmatpush.bf16.msra.mxu0 0
        %313 = vmatpush.bf16.msra.mxu0 0
        %314 = vmatpush.bf16.msra.mxu0 0
        %315 = vmatpush.bf16.msra.mxu0 0
        %316 = vmatpush.bf16.msra.mxu0 0
        %317 = vmatpush.bf16.msra.mxu0 %v279
        %318 = vmatpush.bf16.msra.mxu0 %v277
        %319 = vmatpush.bf16.msra.mxu0 %v275
        %320 = vmatmul.bf16.gmra.mxu0 %v289
        %v321 = vpop.f32.mrf.mxu0
        %v322 = vadd.f32 %v215, %v321
        %v323 = vpop.f32.mrf.mxu0
        %v324 = vadd.f32 %v215, %v323
        %325 = vmatmul.bf16.gmra.mxu0 %v292
        %v326 = vpop.f32.mrf.mxu0
        %v327 = vadd.f32 %v215, %v326
        %v328 = vpop.f32.mrf.mxu0
        %v329 = vadd.f32 %v215, %v328
        %330 = vmatmul.bf16.gmra.mxu0 %v295
        %v331 = vpop.f32.mrf.mxu0
        %v332 = vadd.f32 %v215, %v331
        %v333 = vpop.f32.mrf.mxu0
        %v334 = vadd.f32 %v215, %v333
        %335 = vmatmul.bf16.gmra.mxu0 %v298
        %v336 = vpop.f32.mrf.mxu0
        %v337 = vadd.f32 %v215, %v336
        %v338 = vpop.f32.mrf.mxu0
        %v339 = vadd.f32 %v215, %v338
        %340 = vmatmul.bf16.gmra.mxu0 %v301
        %v341 = vpop.f32.mrf.mxu0
        %v342 = vadd.f32 %v215, %v341
        %v343 = vpop.f32.mrf.mxu0
        %v344 = vadd.f32 %v215, %v343
        %345 = vmatmul.bf16.gmra.mxu0 %v304
        %v346 = vpop.f32.mrf.mxu0
        %v347 = vadd.f32 %v215, %v346
        %v348 = vpop.f32.mrf.mxu0
        %v349 = vadd.f32 %v215, %v348
        %350 = vmatmul.bf16.gmra.mxu0 %v307
        %v351 = vpop.f32.mrf.mxu0
        %v352 = vadd.f32 %v215, %v351
        %v353 = vpop.f32.mrf.mxu0
        %v354 = vadd.f32 %v215, %v353
        %355 = vmatmul.bf16.gmra.mxu0 %v310
        %v356 = vpop.f32.mrf.mxu0
        %v357 = vadd.f32 %v215, %v356
        %v358 = vpop.f32.mrf.mxu0
        %v359 = vadd.f32 %v215, %v358
        %360 = vdwg.mxu0
        %361 = vmatpush.bf16.msra.mxu0 0
        %362 = vmatpush.bf16.msra.mxu0 0
        %363 = vmatpush.bf16.msra.mxu0 0
        %364 = vmatpush.bf16.msra.mxu0 0
        %365 = vmatpush.bf16.msra.mxu0 0
        %366 = vmatpush.bf16.msra.mxu0 %v280
        %367 = vmatpush.bf16.msra.mxu0 %v278
        %368 = vmatpush.bf16.msra.mxu0 %v276
        %369 = vmatmul.bf16.gmra.mxu0 %v289
        %v370 = vpop.f32.mrf.mxu0
        %v371 = vadd.f32 %v216, %v370
        %v372 = vpop.f32.mrf.mxu0
        %v373 = vadd.f32 %v216, %v372
        %374 = vmatmul.bf16.gmra.mxu0 %v292
        %v375 = vpop.f32.mrf.mxu0
        %v376 = vadd.f32 %v216, %v375
        %v377 = vpop.f32.mrf.mxu0
        %v378 = vadd.f32 %v216, %v377
        %379 = vmatmul.bf16.gmra.mxu0 %v295
        %v380 = vpop.f32.mrf.mxu0
        %v381 = vadd.f32 %v216, %v380
        %v382 = vpop.f32.mrf.mxu0
        %v383 = vadd.f32 %v216, %v382
        %384 = vmatmul.bf16.gmra.mxu0 %v298
        %v385 = vpop.f32.mrf.mxu0
        %v386 = vadd.f32 %v216, %v385
        %v387 = vpop.f32.mrf.mxu0
        %v388 = vadd.f32 %v216, %v387
        %389 = vmatmul.bf16.gmra.mxu0 %v301
        %v390 = vpop.f32.mrf.mxu0
        %v391 = vadd.f32 %v216, %v390
        %v392 = vpop.f32.mrf.mxu0
        %v393 = vadd.f32 %v216, %v392
        %394 = vmatmul.bf16.gmra.mxu0 %v304
        %v395 = vpop.f32.mrf.mxu0
        %v396 = vadd.f32 %v216, %v395
        %v397 = vpop.f32.mrf.mxu0
        %v398 = vadd.f32 %v216, %v397
        %399 = vmatmul.bf16.gmra.mxu0 %v307
        %v400 = vpop.f32.mrf.mxu0
        %v401 = vadd.f32 %v216, %v400
        %v402 = vpop.f32.mrf.mxu0
        %v403 = vadd.f32 %v216, %v402
        %404 = vmatmul.bf16.gmra.mxu0 %v310
        %v405 = vpop.f32.mrf.mxu0
        %v406 = vadd.f32 %v216, %v405
        %v407 = vpop.f32.mrf.mxu0
        %v408 = vadd.f32 %v216, %v407
        %409 = vdwg.mxu0
        %v410 = vmax.f32 %v322, 0.0
        %v411 = vmax.f32 %v371, 0.0
        %v412 = vmax.f32 %v324, 0.0
        %v413 = vmax.f32 %v373, 0.0
        %v414 = vmax.f32 %v327, 0.0
        %v415 = vmax.f32 %v376, 0.0
        %v416 = vmax.f32 %v329, 0.0
        %v417 = vmax.f32 %v378, 0.0
        %v418 = vmax.f32 %v332, 0.0
        %v419 = vmax.f32 %v381, 0.0
        %v420 = vmax.f32 %v334, 0.0
        %v421 = vmax.f32 %v383, 0.0
        %v422 = vmax.f32 %v337, 0.0
        %v423 = vmax.f32 %v386, 0.0
        %v424 = vmax.f32 %v339, 0.0
        %v425 = vmax.f32 %v388, 0.0
        %v426 = vmax.f32 %v342, 0.0
        %v427 = vmax.f32 %v391, 0.0
        %v428 = vmax.f32 %v344, 0.0
        %v429 = vmax.f32 %v393, 0.0
        %v430 = vmax.f32 %v347, 0.0
        %v431 = vmax.f32 %v396, 0.0
        %v432 = vmax.f32 %v349, 0.0
        %v433 = vmax.f32 %v398, 0.0
        %v434 = vmax.f32 %v352, 0.0
        %v435 = vmax.f32 %v401, 0.0
        %v436 = vmax.f32 %v354, 0.0
        %v437 = vmax.f32 %v403, 0.0
        %v438 = vmax.f32 %v357, 0.0
        %v439 = vmax.f32 %v406, 0.0
        %v440 = vmax.f32 %v359, 0.0
        %v441 = vmax.f32 %v408, 0.0
        %v442 = vpack.c.bf16 %v412, %v410
        %v443 = vpack.c.bf16 %v416, %v414
        %v444 = vpack.c.bf16 %v420, %v418
        %v445 = vpack.c.bf16 %v424, %v422
        %v446 = vpack.c.bf16 %v428, %v426
        %v447 = vpack.c.bf16 %v432, %v430
        %v448 = vpack.c.bf16 %v436, %v434
        %v449 = vpack.c.bf16 %v440, %v438
        %v450 = vpack.c.bf16 %v413, %v411
        %v451 = vpack.c.bf16 %v417, %v415
        %v452 = vpack.c.bf16 %v421, %v419
        %v453 = vpack.c.bf16 %v425, %v423
        %v454 = vpack.c.bf16 %v429, %v427
        %v455 = vpack.c.bf16 %v433, %v431
        %v456 = vpack.c.bf16 %v437, %v435
        %v457 = vpack.c.bf16 %v441, %v439
        %v458 = vld [vmem:[#allocation2 + $0xc0] sm:$0xf]
        %v459 = vunpack.c.l.bf16 %v458
        %v460 = vld [vmem:[#allocation2] sm:$0xf]
        %v461 = vld [vmem:[#allocation2 + $0x4] sm:$0xf]
        %v462 = vld [vmem:[#allocation2 + $0x8] sm:$0xf]
        %v463 = vld [vmem:[#allocation2 + $0xc] sm:$0xf]
        %v464 = vld [vmem:[#allocation2 + $0x10] sm:$0xf]
        %v465 = vld [vmem:[#allocation2 + $0x14] sm:$0xf]
        %v466 = vld [vmem:[#allocation2 + $0x18] sm:$0xf]
        %v467 = vld [vmem:[#allocation2 + $0x1c] sm:$0xf]
        %v468 = vld [vmem:[#allocation2 + $0x20] sm:$0xf]
        %v469 = vld [vmem:[#allocation2 + $0x24] sm:$0xf]
        %v470 = vld [vmem:[#allocation2 + $0x28] sm:$0xf]
        %v471 = vld [vmem:[#allocation2 + $0x2c] sm:$0xf]
        %v472 = vld [vmem:[#allocation2 + $0x30] sm:$0xf]
        %v473 = vld [vmem:[#allocation2 + $0x34] sm:$0xf]
        %v474 = vld [vmem:[#allocation2 + $0x38] sm:$0xf]
        %v475 = vld [vmem:[#allocation2 + $0x3c] sm:$0xf]
        %v476 = vperm.slane %v459, 0
        %v493 = vunpack.c.l.b16 %v460
        %v494 = vunpack.c.l.b16 %v461
        %v495 = vunpack.c.l.b16 %v462
        %v496 = vunpack.c.l.b16 %v463
        %v497 = vunpack.c.l.b16 %v464
        %v498 = vunpack.c.l.b16 %v465
        %v499 = vunpack.c.l.b16 %v466
        %v500 = vunpack.c.l.b16 %v467
        %v501 = vunpack.c.l.b16 %v468
        %v502 = vunpack.c.l.b16 %v469
        %v503 = vunpack.c.l.b16 %v470
        %v504 = vunpack.c.l.b16 %v471
        %v505 = vunpack.c.l.b16 %v472
        %v506 = vunpack.c.l.b16 %v473
        %v507 = vunpack.c.l.b16 %v474
        %v508 = vunpack.c.l.b16 %v475
        %v509 = vpack.c.b16 %v494, %v493
        %v510 = vpack.c.b16 %v496, %v495
        %v511 = vpack.c.b16 %v498, %v497
        %v512 = vpack.c.b16 %v500, %v499
        %v513 = vpack.c.b16 %v502, %v501
        %v514 = vpack.c.b16 %v504, %v503
        %v515 = vpack.c.b16 %v506, %v505
        %v516 = vpack.c.b16 %v508, %v507
        %525 = vmatpush.bf16.msra.mxu0 %v516
        %526 = vmatpush.bf16.msra.mxu0 %v515
        %527 = vmatpush.bf16.msra.mxu0 %v514
        %528 = vmatpush.bf16.msra.mxu0 %v513
        %529 = vmatpush.bf16.msra.mxu0 %v512
        %530 = vmatpush.bf16.msra.mxu0 %v511
        %531 = vmatpush.bf16.msra.mxu0 %v510
        %532 = vmatpush.bf16.msra.mxu0 %v509
        %533 = vmatmul.bf16.gmra.mxu0 %v442
        %v534 = vpop.f32.mrf.mxu0
        %v535 = vadd.f32 %v476, %v534
        %v536 = vpop.f32.mrf.mxu0
        %v537 = vadd.f32 %v476, %v536
        %538 = vmatmul.bf16.gmra.mxu0 %v443
        %v539 = vpop.f32.mrf.mxu0
        %v540 = vadd.f32 %v476, %v539
        %v541 = vpop.f32.mrf.mxu0
        %v542 = vadd.f32 %v476, %v541
        %543 = vmatmul.bf16.gmra.mxu0 %v444
        %v544 = vpop.f32.mrf.mxu0
        %v545 = vadd.f32 %v476, %v544
        %v546 = vpop.f32.mrf.mxu0
        %v547 = vadd.f32 %v476, %v546
        %548 = vmatmul.bf16.gmra.mxu0 %v445
        %v549 = vpop.f32.mrf.mxu0
        %v550 = vadd.f32 %v476, %v549
        %v551 = vpop.f32.mrf.mxu0
        %v552 = vadd.f32 %v476, %v551
        %553 = vmatmul.bf16.gmra.mxu0 %v446
        %v554 = vpop.f32.mrf.mxu0
        %v555 = vadd.f32 %v476, %v554
        %v556 = vpop.f32.mrf.mxu0
        %v557 = vadd.f32 %v476, %v556
        %558 = vmatmul.bf16.gmra.mxu0 %v447
        %v559 = vpop.f32.mrf.mxu0
        %v560 = vadd.f32 %v476, %v559
        %v561 = vpop.f32.mrf.mxu0
        %v562 = vadd.f32 %v476, %v561
        %563 = vmatmul.bf16.gmra.mxu0 %v448
        %v564 = vpop.f32.mrf.mxu0
        %v565 = vadd.f32 %v476, %v564
        %v566 = vpop.f32.mrf.mxu0
        %v567 = vadd.f32 %v476, %v566
        %568 = vmatmul.bf16.gmra.mxu0 %v449
        %v569 = vpop.f32.mrf.mxu0
        %v570 = vadd.f32 %v476, %v569
        %v571 = vpop.f32.mrf.mxu0
        %v572 = vadd.f32 %v476, %v571
        %573 = vdwg.mxu0
        %v574 = vmax.f32 %v535, 0.0
        %v575 = vmax.f32 %v537, 0.0
        %v576 = vmax.f32 %v540, 0.0
        %v577 = vmax.f32 %v542, 0.0
        %v578 = vmax.f32 %v545, 0.0
        %v579 = vmax.f32 %v547, 0.0
        %v580 = vmax.f32 %v550, 0.0
        %v581 = vmax.f32 %v552, 0.0
        %v582 = vmax.f32 %v555, 0.0
        %v583 = vmax.f32 %v557, 0.0
        %v584 = vmax.f32 %v560, 0.0
        %v585 = vmax.f32 %v562, 0.0
        %v586 = vmax.f32 %v565, 0.0
        %v587 = vmax.f32 %v567, 0.0
        %v588 = vmax.f32 %v570, 0.0
        %v589 = vmax.f32 %v572, 0.0
        %v590 = vld [vmem:[#allocation2 + $0x40] sm:$0xf]
        %v591 = vld [vmem:[#allocation2 + $0x44] sm:$0xf]
        %v592 = vld [vmem:[#allocation2 + $0x48] sm:$0xf]
        %v593 = vld [vmem:[#allocation2 + $0x4c] sm:$0xf]
        %v594 = vld [vmem:[#allocation2 + $0x50] sm:$0xf]
        %v595 = vld [vmem:[#allocation2 + $0x54] sm:$0xf]
        %v596 = vld [vmem:[#allocation2 + $0x58] sm:$0xf]
        %v597 = vld [vmem:[#allocation2 + $0x5c] sm:$0xf]
        %v598 = vld [vmem:[#allocation2 + $0x60] sm:$0xf]
        %v599 = vld [vmem:[#allocation2 + $0x64] sm:$0xf]
        %v600 = vld [vmem:[#allocation2 + $0x68] sm:$0xf]
        %v601 = vld [vmem:[#allocation2 + $0x6c] sm:$0xf]
        %v602 = vld [vmem:[#allocation2 + $0x70] sm:$0xf]
        %v603 = vld [vmem:[#allocation2 + $0x74] sm:$0xf]
        %v604 = vld [vmem:[#allocation2 + $0x78] sm:$0xf]
        %v605 = vld [vmem:[#allocation2 + $0x7c] sm:$0xf]
        %v606 = vperm.slane %v459, 1
        %v623 = vunpack.c.l.b16 %v590
        %v624 = vunpack.c.l.b16 %v591
        %v625 = vunpack.c.l.b16 %v592
        %v626 = vunpack.c.l.b16 %v593
        %v627 = vunpack.c.l.b16 %v594
        %v628 = vunpack.c.l.b16 %v595
        %v629 = vunpack.c.l.b16 %v596
        %v630 = vunpack.c.l.b16 %v597
        %v631 = vunpack.c.l.b16 %v598
        %v632 = vunpack.c.l.b16 %v599
        %v633 = vunpack.c.l.b16 %v600
        %v634 = vunpack.c.l.b16 %v601
        %v635 = vunpack.c.l.b16 %v602
        %v636 = vunpack.c.l.b16 %v603
        %v637 = vunpack.c.l.b16 %v604
        %v638 = vunpack.c.l.b16 %v605
        %v639 = vpack.c.b16 %v624, %v623
        %v640 = vpack.c.b16 %v626, %v625
        %v641 = vpack.c.b16 %v628, %v627
        %v642 = vpack.c.b16 %v630, %v629
        %v643 = vpack.c.b16 %v632, %v631
        %v644 = vpack.c.b16 %v634, %v633
        %v645 = vpack.c.b16 %v636, %v635
        %v646 = vpack.c.b16 %v638, %v637
        %655 = vmatpush.bf16.msra.mxu0 %v646
        %656 = vmatpush.bf16.msra.mxu0 %v645
        %657 = vmatpush.bf16.msra.mxu0 %v644
        %658 = vmatpush.bf16.msra.mxu0 %v643
        %659 = vmatpush.bf16.msra.mxu0 %v642
        %660 = vmatpush.bf16.msra.mxu0 %v641
        %661 = vmatpush.bf16.msra.mxu0 %v640
        %662 = vmatpush.bf16.msra.mxu0 %v639
        %663 = vmatmul.bf16.gmra.mxu0 %v450
        %v664 = vpop.f32.mrf.mxu0
        %v665 = vadd.f32 %v606, %v664
        %v666 = vpop.f32.mrf.mxu0
        %v667 = vadd.f32 %v606, %v666
        %668 = vmatmul.bf16.gmra.mxu0 %v451
        %v669 = vpop.f32.mrf.mxu0
        %v670 = vadd.f32 %v606, %v669
        %v671 = vpop.f32.mrf.mxu0
        %v672 = vadd.f32 %v606, %v671
        %673 = vmatmul.bf16.gmra.mxu0 %v452
        %v674 = vpop.f32.mrf.mxu0
        %v675 = vadd.f32 %v606, %v674
        %v676 = vpop.f32.mrf.mxu0
        %v677 = vadd.f32 %v606, %v676
        %678 = vmatmul.bf16.gmra.mxu0 %v453
        %v679 = vpop.f32.mrf.mxu0
        %v680 = vadd.f32 %v606, %v679
        %v681 = vpop.f32.mrf.mxu0
        %v682 = vadd.f32 %v606, %v681
        %683 = vmatmul.bf16.gmra.mxu0 %v454
        %v684 = vpop.f32.mrf.mxu0
        %v685 = vadd.f32 %v606, %v684
        %v686 = vpop.f32.mrf.mxu0
        %v687 = vadd.f32 %v606, %v686
        %688 = vmatmul.bf16.gmra.mxu0 %v455
        %v689 = vpop.f32.mrf.mxu0
        %v690 = vadd.f32 %v606, %v689
        %v691 = vpop.f32.mrf.mxu0
        %v692 = vadd.f32 %v606, %v691
        %693 = vmatmul.bf16.gmra.mxu0 %v456
        %v694 = vpop.f32.mrf.mxu0
        %v695 = vadd.f32 %v606, %v694
        %v696 = vpop.f32.mrf.mxu0
        %v697 = vadd.f32 %v606, %v696
        %698 = vmatmul.bf16.gmra.mxu0 %v457
        %v699 = vpop.f32.mrf.mxu0
        %v700 = vadd.f32 %v606, %v699
        %v701 = vpop.f32.mrf.mxu0
        %v702 = vadd.f32 %v606, %v701
        %703 = vdwg.mxu0
        %v704 = vmax.f32 %v665, 0.0
        %v705 = vmax.f32 %v667, 0.0
        %v706 = vmax.f32 %v670, 0.0
        %v707 = vmax.f32 %v672, 0.0
        %v708 = vmax.f32 %v675, 0.0
        %v709 = vmax.f32 %v677, 0.0
        %v710 = vmax.f32 %v680, 0.0
        %v711 = vmax.f32 %v682, 0.0
        %v712 = vmax.f32 %v685, 0.0
        %v713 = vmax.f32 %v687, 0.0
        %v714 = vmax.f32 %v690, 0.0
        %v715 = vmax.f32 %v692, 0.0
        %v716 = vmax.f32 %v695, 0.0
        %v717 = vmax.f32 %v697, 0.0
        %v718 = vmax.f32 %v700, 0.0
        %v719 = vmax.f32 %v702, 0.0
        %v720 = vld [vmem:[#allocation2 + $0x80] sm:$0xf]
        %v721 = vld [vmem:[#allocation2 + $0x84] sm:$0xf]
        %v722 = vld [vmem:[#allocation2 + $0x88] sm:$0xf]
        %v723 = vld [vmem:[#allocation2 + $0x8c] sm:$0xf]
        %v724 = vld [vmem:[#allocation2 + $0x90] sm:$0xf]
        %v725 = vld [vmem:[#allocation2 + $0x94] sm:$0xf]
        %v726 = vld [vmem:[#allocation2 + $0x98] sm:$0xf]
        %v727 = vld [vmem:[#allocation2 + $0x9c] sm:$0xf]
        %v728 = vld [vmem:[#allocation2 + $0xa0] sm:$0xf]
        %v729 = vld [vmem:[#allocation2 + $0xa4] sm:$0xf]
        %v730 = vld [vmem:[#allocation2 + $0xa8] sm:$0xf]
        %v731 = vld [vmem:[#allocation2 + $0xac] sm:$0xf]
        %v732 = vld [vmem:[#allocation2 + $0xb0] sm:$0xf]
        %v733 = vld [vmem:[#allocation2 + $0xb4] sm:$0xf]
        %v734 = vld [vmem:[#allocation2 + $0xb8] sm:$0xf]
        %v735 = vld [vmem:[#allocation2 + $0xbc] sm:$0xf]
        %v736 = vpack.c.bf16 %v575, %v574
        %v737 = vpack.c.bf16 %v577, %v576
        %v738 = vpack.c.bf16 %v579, %v578
        %v739 = vpack.c.bf16 %v581, %v580
        %v740 = vpack.c.bf16 %v583, %v582
        %v741 = vpack.c.bf16 %v585, %v584
        %v742 = vpack.c.bf16 %v587, %v586
        %v743 = vpack.c.bf16 %v589, %v588
        %v760 = vunpack.c.l.b16 %v720
        %v761 = vunpack.c.l.b16 %v721
        %v762 = vunpack.c.l.b16 %v722
        %v763 = vunpack.c.l.b16 %v723
        %v764 = vunpack.c.l.b16 %v724
        %v765 = vunpack.c.l.b16 %v725
        %v766 = vunpack.c.l.b16 %v726
        %v767 = vunpack.c.l.b16 %v727
        %v768 = vunpack.c.l.b16 %v728
        %v769 = vunpack.c.l.b16 %v729
        %v770 = vunpack.c.l.b16 %v730
        %v771 = vunpack.c.l.b16 %v731
        %v772 = vunpack.c.l.b16 %v732
        %v773 = vunpack.c.l.b16 %v733
        %v774 = vunpack.c.l.b16 %v734
        %v775 = vunpack.c.l.b16 %v735
        %v776 = vpack.c.b16 %v761, %v760
        %v777 = vpack.c.b16 %v763, %v762
        %v778 = vpack.c.b16 %v765, %v764
        %v779 = vpack.c.b16 %v767, %v766
        %v780 = vpack.c.b16 %v769, %v768
        %v781 = vpack.c.b16 %v771, %v770
        %v782 = vpack.c.b16 %v773, %v772
        %v783 = vpack.c.b16 %v775, %v774
        %792 = vmatpush.bf16.msra.mxu0 %v783
        %793 = vmatpush.bf16.msra.mxu0 %v782
        %794 = vmatpush.bf16.msra.mxu0 %v781
        %795 = vmatpush.bf16.msra.mxu0 %v780
        %796 = vmatpush.bf16.msra.mxu0 %v779
        %797 = vmatpush.bf16.msra.mxu0 %v778
        %798 = vmatpush.bf16.msra.mxu0 %v777
        %799 = vmatpush.bf16.msra.mxu0 %v776
        %800 = vmatmul.bf16.gmra.mxu0 %v736
        %v801 = vpop.f32.mrf.mxu0
        %v802 = vadd.f32 0.0, %v801
        %v803 = vpop.f32.mrf.mxu0
        %v804 = vadd.f32 0.0, %v803
        %805 = vmatmul.bf16.gmra.mxu0 %v737
        %v806 = vpop.f32.mrf.mxu0
        %v807 = vadd.f32 0.0, %v806
        %v808 = vpop.f32.mrf.mxu0
        %v809 = vadd.f32 0.0, %v808
        %810 = vmatmul.bf16.gmra.mxu0 %v738
        %v811 = vpop.f32.mrf.mxu0
        %v812 = vadd.f32 0.0, %v811
        %v813 = vpop.f32.mrf.mxu0
        %v814 = vadd.f32 0.0, %v813
        %815 = vmatmul.bf16.gmra.mxu0 %v739
        %v816 = vpop.f32.mrf.mxu0
        %v817 = vadd.f32 0.0, %v816
        %v818 = vpop.f32.mrf.mxu0
        %v819 = vadd.f32 0.0, %v818
        %820 = vmatmul.bf16.gmra.mxu0 %v740
        %v821 = vpop.f32.mrf.mxu0
        %v822 = vadd.f32 0.0, %v821
        %v823 = vpop.f32.mrf.mxu0
        %v824 = vadd.f32 0.0, %v823
        %825 = vmatmul.bf16.gmra.mxu0 %v741
        %v826 = vpop.f32.mrf.mxu0
        %v827 = vadd.f32 0.0, %v826
        %v828 = vpop.f32.mrf.mxu0
        %v829 = vadd.f32 0.0, %v828
        %830 = vmatmul.bf16.gmra.mxu0 %v742
        %v831 = vpop.f32.mrf.mxu0
        %v832 = vadd.f32 0.0, %v831
        %v833 = vpop.f32.mrf.mxu0
        %v834 = vadd.f32 0.0, %v833
        %835 = vmatmul.bf16.gmra.mxu0 %v743
        %v836 = vpop.f32.mrf.mxu0
        %v837 = vadd.f32 0.0, %v836
        %v838 = vpop.f32.mrf.mxu0
        %v839 = vadd.f32 0.0, %v838
        %840 = vdwg.mxu0
        %v841 = vpack.c.bf16 %v705, %v704
        %v842 = vpack.c.bf16 %v707, %v706
        %v843 = vpack.c.bf16 %v709, %v708
        %v844 = vpack.c.bf16 %v711, %v710
        %v845 = vpack.c.bf16 %v713, %v712
        %v846 = vpack.c.bf16 %v715, %v714
        %v847 = vpack.c.bf16 %v717, %v716
        %v848 = vpack.c.bf16 %v719, %v718
        %849 = vmatpush.bf16.msra.mxu0 %v783
        %850 = vmatpush.bf16.msra.mxu0 %v782
        %851 = vmatpush.bf16.msra.mxu0 %v781
        %852 = vmatpush.bf16.msra.mxu0 %v780
        %853 = vmatpush.bf16.msra.mxu0 %v779
        %854 = vmatpush.bf16.msra.mxu0 %v778
        %855 = vmatpush.bf16.msra.mxu0 %v777
        %856 = vmatpush.bf16.msra.mxu0 %v776
        %857 = vmatmul.bf16.gmra.mxu0 %v841
        %v858 = vpop.f32.mrf.mxu0
        %v859 = vadd.f32 0.0, %v858
        %v860 = vpop.f32.mrf.mxu0
        %v861 = vadd.f32 0.0, %v860
        %862 = vmatmul.bf16.gmra.mxu0 %v842
        %v863 = vpop.f32.mrf.mxu0
        %v864 = vadd.f32 0.0, %v863
        %v865 = vpop.f32.mrf.mxu0
        %v866 = vadd.f32 0.0, %v865
        %867 = vmatmul.bf16.gmra.mxu0 %v843
        %v868 = vpop.f32.mrf.mxu0
        %v869 = vadd.f32 0.0, %v868
        %v870 = vpop.f32.mrf.mxu0
        %v871 = vadd.f32 0.0, %v870
        %872 = vmatmul.bf16.gmra.mxu0 %v844
        %v873 = vpop.f32.mrf.mxu0
        %v874 = vadd.f32 0.0, %v873
        %v875 = vpop.f32.mrf.mxu0
        %v876 = vadd.f32 0.0, %v875
        %877 = vmatmul.bf16.gmra.mxu0 %v845
        %v878 = vpop.f32.mrf.mxu0
        %v879 = vadd.f32 0.0, %v878
        %v880 = vpop.f32.mrf.mxu0
        %v881 = vadd.f32 0.0, %v880
        %882 = vmatmul.bf16.gmra.mxu0 %v846
        %v883 = vpop.f32.mrf.mxu0
        %v884 = vadd.f32 0.0, %v883
        %v885 = vpop.f32.mrf.mxu0
        %v886 = vadd.f32 0.0, %v885
        %887 = vmatmul.bf16.gmra.mxu0 %v847
        %v888 = vpop.f32.mrf.mxu0
        %v889 = vadd.f32 0.0, %v888
        %v890 = vpop.f32.mrf.mxu0
        %v891 = vadd.f32 0.0, %v890
        %892 = vmatmul.bf16.gmra.mxu0 %v848
        %v893 = vpop.f32.mrf.mxu0
        %v894 = vadd.f32 0.0, %v893
        %v895 = vpop.f32.mrf.mxu0
        %v896 = vadd.f32 0.0, %v895
        %897 = vdwg.mxu0
        %v898 = vlaneseq
        %v899 = vand.u32 %v898, 127
        %vm900 = vcmp.eq.s32.totalorder %v899, 0
        %v901 = vsel %vm900, %v802, %v859
        %v902 = vsel %vm900, %v804, %v861
        %v903 = vsel %vm900, %v807, %v864
        %v904 = vsel %vm900, %v809, %v866
        %v905 = vsel %vm900, %v812, %v869
        %v906 = vsel %vm900, %v814, %v871
        %v907 = vsel %vm900, %v817, %v874
        %v908 = vsel %vm900, %v819, %v876
        %v909 = vsel %vm900, %v822, %v879
        %v910 = vsel %vm900, %v824, %v881
        %v911 = vsel %vm900, %v827, %v884
        %v912 = vsel %vm900, %v829, %v886
        %v913 = vsel %vm900, %v832, %v889
        %v914 = vsel %vm900, %v834, %v891
        %v915 = vsel %vm900, %v837, %v894
        %v916 = vsel %vm900, %v839, %v896
        %v917 = vperm.slane %v459, 2
        %v918 = vadd.f32 %v901, %v917
        %v919 = vadd.f32 %v902, %v917
        %v920 = vadd.f32 %v903, %v917
        %v921 = vadd.f32 %v904, %v917
        %v922 = vadd.f32 %v905, %v917
        %v923 = vadd.f32 %v906, %v917
        %v924 = vadd.f32 %v907, %v917
        %v925 = vadd.f32 %v908, %v917
        %v926 = vadd.f32 %v909, %v917
        %v927 = vadd.f32 %v910, %v917
        %v928 = vadd.f32 %v911, %v917
        %v929 = vadd.f32 %v912, %v917
        %v930 = vadd.f32 %v913, %v917
        %v931 = vadd.f32 %v914, %v917
        %v932 = vadd.f32 %v915, %v917
        %v933 = vadd.f32 %v916, %v917
        %934 = vst [vmem:[%s181] sm:$0xff] %v918
        %935 = vst [vmem:[%s181 + $0x8] sm:$0xff] %v919
        %936 = vst [vmem:[%s181 + $0x10] sm:$0xff] %v920
        %937 = vst [vmem:[%s181 + $0x18] sm:$0xff] %v921
        %938 = vst [vmem:[%s181 + $0x20] sm:$0xff] %v922
        %939 = vst [vmem:[%s181 + $0x28] sm:$0xff] %v923
        %940 = vst [vmem:[%s181 + $0x30] sm:$0xff] %v924
        %941 = vst [vmem:[%s181 + $0x38] sm:$0xff] %v925
        %942 = vst [vmem:[%s181 + $0x40] sm:$0xff] %v926
        %943 = vst [vmem:[%s181 + $0x48] sm:$0xff] %v927
        %944 = vst [vmem:[%s181 + $0x50] sm:$0xff] %v928
        %945 = vst [vmem:[%s181 + $0x58] sm:$0xff] %v929
        %946 = vst [vmem:[%s181 + $0x60] sm:$0xff] %v930
        %947 = vst [vmem:[%s181 + $0x68] sm:$0xff] %v931
        %948 = vst [vmem:[%s181 + $0x70] sm:$0xff] %v932
        %949 = vst [vmem:[%s181 + $0x78] sm:$0xff] %v933
        %s950 = sand.u32 %s94, 1
        %s951 = scalar_lea.sflag [#allocation4], %s950
        %s952 = sand.u32 %s94, 1
        %s953 = smul.addr %s952, 128
        %s954 = scalar_lea.vmem [#allocation5], %s953
        // Predicated region
        $region37: #{tpu_custom_call.1} parent=31 // pred_check
          %p955 = pneg %p104
        $region38: #{tpu_custom_call.1} parent=31 // pred_check_branch
          %957 = sbr.rel (%p955) target = $region40
        $region39: #{tpu_custom_call.1} parent=31 // pred_region
          %s958 = smul.u32 16, %s18
          %960 = vsyncadd %s951, 0
          %s961 = smul.addr %s958, 8
          %s962 = scalar_lea.hbm %s3, %s961
          %s963 = sshll.u32 %s954, 4
          %s964 = int_to_ptr.vmem [resolvable:$true] %s963
          %s965 = sshll.u32 %s962, 4
          %s966 = int_to_ptr.hbm [resolvable:$true] %s965
          %971 = dma.vmem_to_hbm [thread:$0]  %s964, 2048, %s966, %s951, 128, 128, 8
        $region40: #{tpu_custom_call.1} parent=31 // pred_fallthru
          _
      $region32: #{tpu_custom_call.1} parent=5 // pred_fallthru
        _
      %p972 = scmp.le.s32.totalorder 2, %s13
      // Predicated region
      $region41: #{tpu_custom_call.1} parent=5 // pred_check
        %p973 = pneg %p972
      $region42: #{tpu_custom_call.1} parent=5 // pred_check_branch
        %975 = sbr.rel (%p973) target = $region44
      $region43: #{tpu_custom_call.1} parent=5 // pred_region
        %s976 = ssub.s32 %s13, 2
        // Predicated region
        $region45: #{tpu_custom_call.1} parent=43 // pred_check
          %p977 = pneg %p110
        $region46: #{tpu_custom_call.1} parent=43 // pred_check_branch
          %979 = sbr.rel (%p977) target = $region48
        $region47: #{tpu_custom_call.1} parent=43 // pred_region
          %s980 = sand.u32 %s95, 1
          %s981 = scalar_lea.sflag [#allocation4], %s980
          %s982 = sand.u32 %s95, 1
          %s983 = smul.addr %s982, 128
          %s984 = scalar_lea.vmem [#allocation5], %s983
          %986 = dma.done %s981, 2048
        $region48: #{tpu_custom_call.1} parent=43 // pred_fallthru
          _
      $region44: #{tpu_custom_call.1} parent=5 // pred_fallthru
        _
    $region6: #{tpu_custom_call.1} parent=1 // loop_footer
      %s17 = sadd.s32 1, %s13
    $region7: #{tpu_custom_call.1} parent=1 // loop_footer_branch
      %12 = sbr.rel target = $region3
    $region8: #{tpu_custom_call.1} parent=1 // loop_exit
      _
    %987 = vsyncpa [#allocation3], 1
    %s988 = scalar_lea.sflag [#allocation3], 1
    %989 = vsyncpa %s988, 1
    %990 = vsyncpa [#allocation4], 1
    %s991 = scalar_lea.sflag [#allocation4], 1
    %992 = vsyncpa %s991, 1

</llo_original>
